<compile_context>
chip_gen: v6e
topology: v6e:2x2x1
jax: 0.10.0
libtpu: 0.0.40
codegen_flags: <defaults>
</compile_context>

<pallas_src>
import math

import jax
import jax.numpy as jnp
from jax import lax
from jax.experimental import pallas as pl
from jax.experimental.pallas import tpu as pltpu

_BN_EPS = 1e-5   # nn.BatchNorm2d default eps


def _choose_tile(m):
    # multiple of 8 (sublane), capped at 256
    return min(256, ((m + 7) // 8) * 8)


def _pad_rows(x2d, tm):
    m = x2d.shape[0]
    mp = pl.cdiv(m, tm) * tm
    if mp != m:
        x2d = jnp.pad(x2d, ((0, mp - m), (0, 0)))
    return x2d, m


# ------------------- Pallas kernel 1: BN batch statistics -------------------

def _stats_kernel(x_ref, s_ref, sq_ref, acc_s, acc_sq):
    @pl.when(pl.program_id(0) == 0)
    def _():
        acc_s[...] = jnp.zeros_like(acc_s)
        acc_sq[...] = jnp.zeros_like(acc_sq)

    x = x_ref[...]
    acc_s[...] += jnp.sum(x, axis=0, keepdims=True)
    acc_sq[...] += jnp.sum(x * x, axis=0, keepdims=True)

    @pl.when(pl.program_id(0) == pl.num_programs(0) - 1)
    def _():
        s_ref[...] = acc_s[...]
        sq_ref[...] = acc_sq[...]


def batchnorm_scale_shift(x2d, gamma, beta, eps=_BN_EPS):
    """Training-mode BatchNorm2d: batch mean / biased var over N*H*W rows."""
    m0, c = x2d.shape
    tm = _choose_tile(m0)
    xp, m = _pad_rows(x2d.astype(jnp.float32), tm)   # zero rows do not change sums
    mp = xp.shape[0]
    s, sq = pl.pallas_call(
        _stats_kernel,
        out_shape=(jax.ShapeDtypeStruct((1, c), jnp.float32),
                   jax.ShapeDtypeStruct((1, c), jnp.float32)),
        grid=(mp // tm,),
        in_specs=[pl.BlockSpec((tm, c), lambda i: (i, 0))],
        out_specs=(pl.BlockSpec((1, c), lambda i: (0, 0)),
                   pl.BlockSpec((1, c), lambda i: (0, 0))),
        scratch_shapes=[pltpu.VMEM((1, c), jnp.float32),
                        pltpu.VMEM((1, c), jnp.float32)],
        compiler_params=pltpu.CompilerParams(dimension_semantics=("arbitrary",)),
    )(xp)
    mean = (s / m).reshape(c)
    var = jnp.maximum((sq / m).reshape(c) - mean * mean, 0.0)   # clamp fp cancellation
    scale = gamma / jnp.sqrt(var + eps)
    shift = beta - mean * scale
    return scale, shift


# --------------- Pallas kernel 2: fused BN-affine + ReLU + conv ---------------

def _bn_relu_matmul_kernel(cols_ref, scale_ref, shift_ref, w_ref, o_ref):
    a = cols_ref[...] * scale_ref[...] + shift_ref[...]   # fused BN affine (f32)
    a = jnp.maximum(a, 0.0)                               # ReLU
    o_ref[...] = jnp.dot(a.astype(jnp.bfloat16), w_ref[...],
                         preferred_element_type=jnp.float32)


def bn_relu_conv_matmul(cols, scale_cols, shift_cols, w_mat):
    """out = relu(cols * scale + shift) @ W, scale/shift broadcast per column."""
    m0, k = cols.shape
    n = w_mat.shape[1]
    tm = _choose_tile(m0)
    xp, m = _pad_rows(cols.astype(jnp.float32), tm)
    mp = xp.shape[0]
    out = pl.pallas_call(
        _bn_relu_matmul_kernel,
        out_shape=jax.ShapeDtypeStruct((mp, n), jnp.float32),
        grid=(mp // tm,),
        in_specs=[pl.BlockSpec((tm, k), lambda i: (i, 0)),
                  pl.BlockSpec((1, k), lambda i: (0, 0)),
                  pl.BlockSpec((1, k), lambda i: (0, 0)),
                  pl.BlockSpec((k, n), lambda i: (0, 0))],
        out_specs=pl.BlockSpec((tm, n), lambda i: (i, 0)),
        compiler_params=pltpu.CompilerParams(
            dimension_semantics=("parallel",),
            vmem_limit_bytes=32 * 1024 * 1024),
    )(xp,
      scale_cols.reshape(1, k).astype(jnp.float32),
      shift_cols.reshape(1, k).astype(jnp.float32),
      w_mat.astype(jnp.bfloat16))
    return out[:m]


# ------------------------------ plain-JAX glue ------------------------------

def _pad_with_channel_value(x, pad, pad_val):
    n, h, w, c = x.shape
    out = jnp.broadcast_to(pad_val.reshape(1, 1, 1, c).astype(x.dtype),
                           (n, h + 2 * pad, w + 2 * pad, c))
    return out.at[:, pad:pad + h, pad:pad + w, :].set(x)


def _im2col_prepadded(xp, kh, kw, stride):
    # (N,Hp,Wp,C) -> (N*Ho*Wo, kh*kw*C); column order (tap, C), C fastest.
    n, hp, wp, c = xp.shape
    ho = (hp - kh) // stride + 1
    wo = (wp - kw) // stride + 1
    patches = []
    for i in range(kh):
        for j in range(kw):
            patches.append(xp[:, i:i + stride * ho:stride, j:j + stride * wo:stride, :])
    cols = jnp.stack(patches, axis=3)            # (N, Ho, Wo, kh*kw, C)
    return cols.reshape(n * ho * wo, kh * kw * c), (n, ho, wo)


def _bn_relu_conv_branch(x_nhwc, gamma, beta, w_mat, stride, pad, kh=3, kw=3):
    """BN(train stats) -> ReLU -> Conv2d(kh x kw, bias=False), fully fused into
    one stats kernel + one affine+ReLU+matmul kernel."""
    n, h, w, c = x_nhwc.shape
    scale, shift = batchnorm_scale_shift(x_nhwc.reshape(-1, c), gamma, beta)
    # Sentinel pad value: fused affine maps it to exactly -1, so ReLU -> 0,
    # reproducing zero padding of the *activated* feature map.
    pad_val = -(1.0 + shift) / scale
    xp = _pad_with_channel_value(x_nhwc.astype(jnp.float32), pad, pad_val)
    cols, (n, ho, wo) = _im2col_prepadded(xp, kh, kw, stride)
    # TODO(synk): im2col stays plain-JAX glue (materializes the kh*kw blow-up in HBM);
    # an in-kernel tap accumulation would need manual DMA for the strided taps.
    scale_cols = jnp.tile(scale, kh * kw)
    shift_cols = jnp.tile(shift, kh * kw)
    out2d = bn_relu_conv_matmul(cols, scale_cols, shift_cols, w_mat)
    return out2d.reshape(n, ho, wo, -1)


def two_residual_layer(up_nchw, cur_nchw, params):
    """Forward of _TwoResidualLayer.  Inputs / output in NCHW like PyTorch."""
    up = jnp.transpose(up_nchw, (0, 2, 3, 1)).astype(jnp.float32)    # NCHW -> NHWC
    cur = jnp.transpose(cur_nchw, (0, 2, 3, 1)).astype(jnp.float32)
    up_down = _bn_relu_conv_branch(up, params['sd_gamma'], params['sd_beta'],
                                   params['sd_w'], stride=2, pad=2)
    cur_conv = _bn_relu_conv_branch(cur, params['cc_gamma'], params['cc_beta'],
                                    params['cc_w'], stride=1, pad=1)
    x_cat = jnp.concatenate([up_down, cur_conv], axis=-1)            # torch.cat(dim=1)
    # TODO(synk): the reference's second torch.cat([x_cat, current_feature]) uses the
    # default dim=0, which is shape-inconsistent (channel mismatch); implemented here
    # as a channel concat of the raw current feature instead.
    x_cat = jnp.concatenate([x_cat, cur], axis=-1)
    return jnp.transpose(x_cat, (0, 3, 1, 2))                        # back to NCHW


# --------------------------- params & pure-JAX ref ---------------------------

def _kaiming_conv(key, cout, cin, kh, kw):
    fan_in = cin * kh * kw
    std = math.sqrt(2.0 / fan_in)
    w_oihw = jax.random.normal(key, (cout, cin, kh, kw), jnp.float32) * std
    return jnp.transpose(w_oihw, (2, 3, 1, 0)).reshape(kh * kw * cin, cout)


def init_params(key, up_features, cur_features):
    k1, k2 = jax.random.split(key)
    return dict(
        sd_gamma=jnp.ones((up_features,), jnp.float32),
        sd_beta=jnp.zeros((up_features,), jnp.float32),
        sd_w=_kaiming_conv(k1, up_features, up_features, 3, 3),
        cc_gamma=jnp.ones((cur_features,), jnp.float32),
        cc_beta=jnp.zeros((cur_features,), jnp.float32),
        cc_w=_kaiming_conv(k2, cur_features, cur_features, 3, 3),
    )


def _ref_branch(x_nhwc, gamma, beta, w_mat, stride, pad, kh=3, kw=3):
    c = x_nhwc.shape[-1]
    x2d = x_nhwc.reshape(-1, c)
    mean, var = x2d.mean(0), x2d.var(0)
    a = jnp.maximum((x_nhwc - mean) / jnp.sqrt(var + _BN_EPS) * gamma + beta, 0.0)
    w = w_mat.reshape(kh, kw, c, -1)
    return lax.conv_general_dilated(a, w, (stride, stride), [(pad, pad), (pad, pad)],
                                    dimension_numbers=('NHWC', 'HWIO', 'NHWC'))


def _ref_two_residual_layer(up_nchw, cur_nchw, params):
    up = jnp.transpose(up_nchw, (0, 2, 3, 1)).astype(jnp.float32)
    cur = jnp.transpose(cur_nchw, (0, 2, 3, 1)).astype(jnp.float32)
    a = _ref_branch(up, params['sd_gamma'], params['sd_beta'], params['sd_w'], 2, 2)
    b = _ref_branch(cur, params['cc_gamma'], params['cc_beta'], params['cc_w'], 1, 1)
    return jnp.transpose(jnp.concatenate([a, b, cur], axis=-1), (0, 3, 1, 2))


if __name__ == "__main__":
    key = jax.random.PRNGKey(0)
    k_up, k_cur, k_p = jax.random.split(key, 3)
    up_features, cur_features = 16, 16
    # Spatial sizes chosen so sample_down (k3, s2, p2) output matches the current
    # feature's spatial size: (30 + 2*2 - 3)//2 + 1 == 16.
    up = jax.random.normal(k_up, (2, up_features, 30, 30), jnp.float32)      # NCHW
    cur = jax.random.normal(k_cur, (2, cur_features, 16, 16), jnp.float32)   # NCHW
    params = init_params(k_p, up_features, cur_features)

    out = two_residual_layer(up, cur, params)
    out = jax.block_until_ready(out)

    expected_shape = (2, up_features + 2 * cur_features, 16, 16)
    assert tuple(out.shape) == expected_shape, out.shape
    assert bool(jnp.all(jnp.isfinite(out)))

    # Pure-JAX reference check (loose tolerance: bf16 MXU operands).
    ref = _ref_two_residual_layer(up, cur, params)
    max_err = float(jnp.max(jnp.abs(out - ref)))
    tol = 5e-2 * float(jnp.max(jnp.abs(ref))) + 5e-2
    assert max_err < tol, (max_err, tol)

    print("KERNEL_OK")
</pallas_src>

<mosaic_0001>
module attributes {stable_mosaic.version = 11 : i64} {
  func.func @_stats_kernel(%arg0: i32, %arg1: memref<256x16xf32, #tpu.memory_space<vmem>>, %arg2: memref<1x16xf32, #tpu.memory_space<vmem>>, %arg3: memref<1x16xf32, #tpu.memory_space<vmem>>, %arg4: memref<1x16xf32, #tpu.memory_space<vmem>>, %arg5: memref<1x16xf32, #tpu.memory_space<vmem>>) attributes {dimension_semantics = [#tpu.dimension_semantics<arbitrary>], iteration_bounds = array<i64: 8>, scalar_prefetch = 0 : i64, scratch_operands = 2 : i64, tpu.core_type = #tpu.core_type<tc>, window_params = [{transform_indices = @transform_0, window_bounds = array<i64: 256, 16>}, {pipeline_mode = #tpu.pipeline_mode<synchronous>, transform_indices = @transform_1, window_bounds = array<i64: 1, 16>}, {pipeline_mode = #tpu.pipeline_mode<synchronous>, transform_indices = @transform_2, window_bounds = array<i64: 1, 16>}]} {
    %c0_i32 = arith.constant 0 : i32
    %0 = arith.cmpi eq, %arg0, %c0_i32 : i32
    %1 = arith.extui %0 : i1 to i32
    %c0_i32_0 = arith.constant 0 : i32
    %2 = arith.cmpi ne, %1, %c0_i32_0 : i32
    scf.if %2 {
      %cst_12 = arith.constant 0.000000e+00 : f32
      %18 = vector.broadcast %cst_12 : f32 to vector<1x16xf32>
      %c0_13 = arith.constant 0 : index
      %c0_14 = arith.constant 0 : index
      %19 = vector.load %arg4[%c0_13, %c0_14] : memref<1x16xf32, #tpu.memory_space<vmem>>, vector<1x16xf32>
      tpu.vector_store %arg4[%c0_13, %c0_14], %18 {strides = array<i32>} : memref<1x16xf32, #tpu.memory_space<vmem>>, vector<1x16xf32>,
      %cst_15 = arith.constant 0.000000e+00 : f32
      %20 = vector.broadcast %cst_15 : f32 to vector<1x16xf32>
      %c0_16 = arith.constant 0 : index
      %c0_17 = arith.constant 0 : index
      %21 = vector.load %arg5[%c0_16, %c0_17] : memref<1x16xf32, #tpu.memory_space<vmem>>, vector<1x16xf32>
      tpu.vector_store %arg5[%c0_16, %c0_17], %20 {strides = array<i32>} : memref<1x16xf32, #tpu.memory_space<vmem>>, vector<1x16xf32>,
    } else {
    }
    %c0 = arith.constant 0 : index
    %c0_1 = arith.constant 0 : index
    %3 = vector.load %arg1[%c0, %c0_1] : memref<256x16xf32, #tpu.memory_space<vmem>>, vector<256x16xf32>
    %c0_2 = arith.constant 0 : index
    %c0_3 = arith.constant 0 : index
    %4 = vector.load %arg4[%c0_2, %c0_3] : memref<1x16xf32, #tpu.memory_space<vmem>>, vector<1x16xf32>
    %cst = arith.constant dense<0.000000e+00> : vector<16xf32>
    %5 = vector.multi_reduction <add>, %3, %cst [0] : vector<256x16xf32> to vector<16xf32>
    %6 = vector.shape_cast %5 : vector<16xf32> to vector<1x16xf32>
    %7 = arith.addf %4, %6 : vector<1x16xf32>
    %c0_4 = arith.constant 0 : index
    %c0_5 = arith.constant 0 : index
    %8 = vector.load %arg4[%c0_4, %c0_5] : memref<1x16xf32, #tpu.memory_space<vmem>>, vector<1x16xf32>
    tpu.vector_store %arg4[%c0_4, %c0_5], %7 {strides = array<i32>} : memref<1x16xf32, #tpu.memory_space<vmem>>, vector<1x16xf32>,
    %c0_6 = arith.constant 0 : index
    %c0_7 = arith.constant 0 : index
    %9 = vector.load %arg5[%c0_6, %c0_7] : memref<1x16xf32, #tpu.memory_space<vmem>>, vector<1x16xf32>
    %10 = arith.mulf %3, %3 : vector<256x16xf32>
    %cst_8 = arith.constant dense<0.000000e+00> : vector<16xf32>
    %11 = vector.multi_reduction <add>, %10, %cst_8 [0] : vector<256x16xf32> to vector<16xf32>
    %12 = vector.shape_cast %11 : vector<16xf32> to vector<1x16xf32>
    %13 = arith.addf %9, %12 : vector<1x16xf32>
    %c0_9 = arith.constant 0 : index
    %c0_10 = arith.constant 0 : index
    %14 = vector.load %arg5[%c0_9, %c0_10] : memref<1x16xf32, #tpu.memory_space<vmem>>, vector<1x16xf32>
    tpu.vector_store %arg5[%c0_9, %c0_10], %13 {strides = array<i32>} : memref<1x16xf32, #tpu.memory_space<vmem>>, vector<1x16xf32>,
    %c7_i32 = arith.constant 7 : i32
    %15 = arith.cmpi eq, %arg0, %c7_i32 : i32
    %16 = arith.extui %15 : i1 to i32
    %c0_i32_11 = arith.constant 0 : i32
    %17 = arith.cmpi ne, %16, %c0_i32_11 : i32
    scf.if %17 {
      %c0_12 = arith.constant 0 : index
      %c0_13 = arith.constant 0 : index
      %18 = vector.load %arg4[%c0_12, %c0_13] : memref<1x16xf32, #tpu.memory_space<vmem>>, vector<1x16xf32>
      %c0_14 = arith.constant 0 : index
      %c0_15 = arith.constant 0 : index
      %19 = vector.load %arg2[%c0_14, %c0_15] : memref<1x16xf32, #tpu.memory_space<vmem>>, vector<1x16xf32>
      tpu.vector_store %arg2[%c0_14, %c0_15], %18 {strides = array<i32>} : memref<1x16xf32, #tpu.memory_space<vmem>>, vector<1x16xf32>,
      %c0_16 = arith.constant 0 : index
      %c0_17 = arith.constant 0 : index
      %20 = vector.load %arg5[%c0_16, %c0_17] : memref<1x16xf32, #tpu.memory_space<vmem>>, vector<1x16xf32>
      %c0_18 = arith.constant 0 : index
      %c0_19 = arith.constant 0 : index
      %21 = vector.load %arg3[%c0_18, %c0_19] : memref<1x16xf32, #tpu.memory_space<vmem>>, vector<1x16xf32>
      tpu.vector_store %arg3[%c0_18, %c0_19], %20 {strides = array<i32>} : memref<1x16xf32, #tpu.memory_space<vmem>>, vector<1x16xf32>,
    } else {
    }
    return
  }
  func.func @transform_0(%arg0: i32) -> (i32, i32) {
    %c0_i32 = arith.constant 0 : i32
    %c0_i32_0 = arith.constant 0 : i32
    return %arg0, %c0_i32 : i32, i32
  }
  func.func @transform_1(%arg0: i32) -> (i32, i32) {
    %c0_i32 = arith.constant 0 : i32
    %c0_i32_0 = arith.constant 0 : i32
    %c0_i32_1 = arith.constant 0 : i32
    return %c0_i32, %c0_i32_0 : i32, i32
  }
  func.func @transform_2(%arg0: i32) -> (i32, i32) {
    %c0_i32 = arith.constant 0 : i32
    %c0_i32_0 = arith.constant 0 : i32
    %c0_i32_1 = arith.constant 0 : i32
    return %c0_i32, %c0_i32_0 : i32, i32
  }
}

</mosaic_0001>

<llo_original>
// kernel: tpu_custom_call.1
$region0: #{tpu_custom_call.1}
  #allocation0 [shape = 'u32[]', space=smem, size = 0x4, offset = 0x4, fixed_abs, tag = 'smem constant byte address 0x4 - core index']
  #allocation1 [shape = 'u32[144,128]{1,0:T(1,128)}', space=vmem, size = 0x12000, scoped, tag = 'internal scratch']
  #allocation2 [shape = 'f32[1,16]{1,0:T(1,128)}', space=vmem, size = 0x200, scoped, tag = 'scratch operand']
  #allocation3 [shape = 'f32[1,16]{1,0:T(1,128)}', space=vmem, size = 0x200, scoped, tag = 'scratch operand']
  %s0 = inlined_call_operand.vmem [shape: f32[2048,16], index: 0, kind: input, shape index: {}]
  %s1 = inlined_call_operand.hbm [shape: f32[1,16], index: 1, kind: output, shape index: {0}]
  %s2 = inlined_call_operand.hbm [shape: f32[1,16], index: 2, kind: output, shape index: {1}]
  %3 = xla_tuple %s1, %s2
  %s4 = sld [smem:[#allocation0]]
  $region53: #{tpu_custom_call.1} parent=0
    _
  %s6 = ssub.s32 1, %s4
  %s7 = scalar_select 0, %s6, %s4
  $region1: #{tpu_custom_call.1} parent=0
    #allocation4 [shape = 'u8[512]{0}', space=vmem, size = 0x400, scoped, tag = 'output window, operand 0, single buffered']
    #allocation5 [shape = 's32[2]{0}', space=sflag, size = 0x8, scoped, tag = 'scoped memory for tpu_custom_call.1']
    #allocation6 [shape = 'u8[512]{0}', space=vmem, size = 0x400, scoped, tag = 'output window, operand 1, single buffered']
    #allocation7 [shape = 's32[1]{0}', space=sflag, size = 0x4, scoped, tag = 'scoped memory for tpu_custom_call.1']
    %8 = vsyncpa [#allocation5], 0
    %9 = vsyncpa [#allocation7], 0
    loop: start=0, step=1, limit=10
    $region2: #{tpu_custom_call.1} parent=1 // loop_pre_header
      _
    $region3: #{tpu_custom_call.1} parent=1 // loop_header
      %s11 = sphi 0, %s15
      %p12 = scmp.ge.s32.totalorder %s11, 10
      %s21 = sphi 0, %s23
      %s24 = sphi 0, %s21
      %s25 = sphi 0, %s24
      %s41 = sphi 0, %s25
      %s45 = sphi 0, %s45
      %s47 = sphi 0, %s45
      %s48 = sphi 0, %s47
      %s62 = sphi 0, %s48
      %s66 = sphi 0, %s66
      %s68 = sphi 0, %s66
      %s69 = sphi 0, %s68
      %s83 = sphi 0, %s69
    $region4: #{tpu_custom_call.1} parent=1 // loop_header_branch
      %14 = sbr.rel (%p12) target = $region8
    $region5: #{tpu_custom_call.1} parent=1 // loop_body
      %s16 = ssub.s32 %s11, 1
      %s17 = ssub.s32 %s11, 2
      %s18 = sadd.s32 %s11, 1
      %s19 = ssub.s32 %s11, %s18
      %p20 = scmp.eq.s32.totalorder %s19, 0
      %s22 = sadd.s32 %s21, 1
      %s23 = scalar_select %p20, %s21, %s22
      %p26 = pneg %p20
      %p27 = scmp.eq.s32.totalorder %s11, 7
      %p28 = por %p26, %p27
      %p29 = scmp.ne.s32.totalorder %s21, %s24
      %p30 = scmp.eq.s32.totalorder %s11, 0
      %p31 = por %p29, %p30
      %p32 = scmp.ne.s32.totalorder %s21, %s24
      %p33 = scmp.eq.s32.totalorder %s16, 7
      %p34 = por %p32, %p33
      %p35 = scmp.ne.s32.totalorder %s24, %s25
      %p36 = scmp.eq.s32.totalorder %s16, 0
      %p37 = por %p35, %p36
      %p38 = scmp.ne.s32.totalorder %s24, %s25
      %p39 = scmp.eq.s32.totalorder %s17, 7
      %p40 = por %p38, %p39
      %p42 = scmp.ne.s32.totalorder %s25, %s41
      %p43 = scmp.eq.s32.totalorder %s17, 0
      %p44 = por %p42, %p43
      %s46 = sadd.s32 %s45, 1
      %p49 = scmp.eq.s32.totalorder %s11, 7
      %p50 = scmp.ne.s32.totalorder %s45, %s47
      %p51 = scmp.eq.s32.totalorder %s11, 0
      %p52 = por %p50, %p51
      %p53 = scmp.ne.s32.totalorder %s45, %s47
      %p54 = scmp.eq.s32.totalorder %s16, 7
      %p55 = por %p53, %p54
      %p56 = scmp.ne.s32.totalorder %s47, %s48
      %p57 = scmp.eq.s32.totalorder %s16, 0
      %p58 = por %p56, %p57
      %p59 = scmp.ne.s32.totalorder %s47, %s48
      %p60 = scmp.eq.s32.totalorder %s17, 7
      %p61 = por %p59, %p60
      %p63 = scmp.ne.s32.totalorder %s48, %s62
      %p64 = scmp.eq.s32.totalorder %s17, 0
      %p65 = por %p63, %p64
      %s67 = sadd.s32 %s66, 1
      %p70 = scmp.eq.s32.totalorder %s11, 7
      %p71 = scmp.ne.s32.totalorder %s66, %s68
      %p72 = scmp.eq.s32.totalorder %s11, 0
      %p73 = por %p71, %p72
      %p74 = scmp.ne.s32.totalorder %s66, %s68
      %p75 = scmp.eq.s32.totalorder %s16, 7
      %p76 = por %p74, %p75
      %p77 = scmp.ne.s32.totalorder %s68, %s69
      %p78 = scmp.eq.s32.totalorder %s16, 0
      %p79 = por %p77, %p78
      %p80 = scmp.ne.s32.totalorder %s68, %s69
      %p81 = scmp.eq.s32.totalorder %s17, 7
      %p82 = por %p80, %p81
      %p84 = scmp.ne.s32.totalorder %s69, %s83
      %p85 = scmp.eq.s32.totalorder %s17, 0
      %p86 = por %p84, %p85
      %p87 = scmp.le.s32.totalorder 1, %s11
      %p88 = scmp.lt.s32.totalorder %s11, 9
      %p89 = pnand %p87, %p88
      %p90 = pneg %p89
      // Predicated region
      $region9: #{tpu_custom_call.1} parent=5 // pred_check
        _
      $region10: #{tpu_custom_call.1} parent=5 // pred_check_branch
        %92 = sbr.rel (%p89) target = $region12
      $region11: #{tpu_custom_call.1} parent=5 // pred_region
        %s93 = ssub.s32 %s11, 1
      $region12: #{tpu_custom_call.1} parent=5 // pred_fallthru
        _
      %p94 = scmp.lt.s32.totalorder %s11, 8
      // Predicated region
      $region13: #{tpu_custom_call.1} parent=5 // pred_check
        %p95 = pneg %p94
      $region14: #{tpu_custom_call.1} parent=5 // pred_check_branch
        %97 = sbr.rel (%p95) target = $region16
      $region15: #{tpu_custom_call.1} parent=5 // pred_region
        // Predicated region
        $region17: #{tpu_custom_call.1} parent=15 // pred_check
          %p98 = pneg %p31
        $region18: #{tpu_custom_call.1} parent=15 // pred_check_branch
          %100 = sbr.rel (%p98) target = $region20
        $region19: #{tpu_custom_call.1} parent=15 // pred_region
          %s101 = smul.u32 32, %s11
          %p102 = scmp.lt.s32.totalorder %s101, 255
          %s103 = scalar_select %p102, %s101, 255
          %s104 = smul.addr %s103, 8
          %s105 = scalar_lea.vmem %s0, %s104
          %s106 = smul.u32 32, %s11
        $region20: #{tpu_custom_call.1} parent=15 // pred_fallthru
          _
      $region16: #{tpu_custom_call.1} parent=5 // pred_fallthru
        _
      %p107 = scmp.le.s32.totalorder 1, %s11
      %p108 = scmp.lt.s32.totalorder %s11, 9
      %p109 = pnand %p107, %p108
      %p110 = pneg %p109
      // Predicated region
      $region21: #{tpu_custom_call.1} parent=5 // pred_check
        _
      $region22: #{tpu_custom_call.1} parent=5 // pred_check_branch
        %112 = sbr.rel (%p109) target = $region24
      $region23: #{tpu_custom_call.1} parent=5 // pred_region
        %s113 = ssub.s32 %s11, 1
        %s114 = smul.u32 32, %s16
        %p115 = scmp.lt.s32.totalorder %s114, 255
        %s116 = scalar_select %p115, %s114, 255
        %s117 = smul.addr %s116, 8
        %s118 = scalar_lea.vmem %s0, %s117
        %p119 = pneg %p37
        %p120 = pneg %p34
        %p121 = pneg %p58
        %p122 = pneg %p55
        %p123 = pneg %p79
        %p124 = pneg %p76
        %s125 = smul.u32 32, %s16
        %p126 = scmp.lt.s32.totalorder %s125, 255
        %s127 = scalar_select %p126, %s125, 255
        %s128 = smul.addr %s127, 8
        %s129 = scalar_lea.vmem %s0, %s128
        %s130 = smul.u32 32, %s16
        %p131 = scmp.eq.s32.totalorder %s16, 0
        // Predicated region
        $region25: #{tpu_custom_call.1} parent=23 // pred_check
          %p132 = pneg %p131
        $region26: #{tpu_custom_call.1} parent=23 // pred_check_branch
          %134 = sbr.rel (%p132) target = $region28
        $region27: #{tpu_custom_call.1} parent=23 // pred_region
          %vm135 = vcmask 122880
          %136 = vst.msk [vmem:[#allocation2] sm:$0x1] %vm135, 0.0
          %137 = vst.msk [vmem:[#allocation3] sm:$0x1] %vm135, 0.0
        $region28: #{tpu_custom_call.1} parent=23 // pred_fallthru
          _
        %v138 = vld [vmem:[%s129] sm:$0xff]
        %v139 = vld [vmem:[%s129 + $0x8] sm:$0xff]
        %v140 = vld [vmem:[%s129 + $0x10] sm:$0xff]
        %v141 = vld [vmem:[%s129 + $0x18] sm:$0xff]
        %v142 = vld [vmem:[%s129 + $0x20] sm:$0xff]
        %v143 = vld [vmem:[%s129 + $0x28] sm:$0xff]
        %v144 = vld [vmem:[%s129 + $0x30] sm:$0xff]
        %v145 = vld [vmem:[%s129 + $0x38] sm:$0xff]
        %v146 = vld [vmem:[%s129 + $0x40] sm:$0xff]
        %v147 = vld [vmem:[%s129 + $0x48] sm:$0xff]
        %v148 = vld [vmem:[%s129 + $0x50] sm:$0xff]
        %v149 = vld [vmem:[%s129 + $0x58] sm:$0xff]
        %v150 = vld [vmem:[%s129 + $0x60] sm:$0xff]
        %v151 = vld [vmem:[%s129 + $0x68] sm:$0xff]
        %v152 = vld [vmem:[%s129 + $0x70] sm:$0xff]
        %v153 = vld [vmem:[%s129 + $0x78] sm:$0xff]
        %v154 = vld [vmem:[%s129 + $0x80] sm:$0xff]
        %v155 = vld [vmem:[%s129 + $0x88] sm:$0xff]
        %v156 = vld [vmem:[%s129 + $0x90] sm:$0xff]
        %v157 = vld [vmem:[%s129 + $0x98] sm:$0xff]
        %v158 = vld [vmem:[%s129 + $0xa0] sm:$0xff]
        %v159 = vld [vmem:[%s129 + $0xa8] sm:$0xff]
        %v160 = vld [vmem:[%s129 + $0xb0] sm:$0xff]
        %v161 = vld [vmem:[%s129 + $0xb8] sm:$0xff]
        %v162 = vld [vmem:[%s129 + $0xc0] sm:$0xff]
        %v163 = vld [vmem:[%s129 + $0xc8] sm:$0xff]
        %v164 = vld [vmem:[%s129 + $0xd0] sm:$0xff]
        %v165 = vld [vmem:[%s129 + $0xd8] sm:$0xff]
        %v166 = vld [vmem:[%s129 + $0xe0] sm:$0xff]
        %v167 = vld [vmem:[%s129 + $0xe8] sm:$0xff]
        %v168 = vld [vmem:[%s129 + $0xf0] sm:$0xff]
        %v169 = vld [vmem:[%s129 + $0xf8] sm:$0xff]
        %v170 = vld [vmem:[#allocation2] sm:$0x1]
        %vm171 = vcmask 130048
        %v172 = vsel %vm171, %v138, 0.0
        %v173 = vsel %vm171, %v139, 0.0
        %v174 = vadd.f32 %v172, %v173
        %v175 = vsel %vm171, %v140, 0.0
        %v176 = vadd.f32 %v174, %v175
        %v177 = vsel %vm171, %v141, 0.0
        %v178 = vadd.f32 %v176, %v177
        %v179 = vsel %vm171, %v142, 0.0
        %v180 = vadd.f32 %v178, %v179
        %v181 = vsel %vm171, %v143, 0.0
        %v182 = vadd.f32 %v180, %v181
        %v183 = vsel %vm171, %v144, 0.0
        %v184 = vadd.f32 %v182, %v183
        %v185 = vsel %vm171, %v145, 0.0
        %v186 = vadd.f32 %v184, %v185
        %v187 = vsel %vm171, %v146, 0.0
        %v188 = vadd.f32 %v186, %v187
        %v189 = vsel %vm171, %v147, 0.0
        %v190 = vadd.f32 %v188, %v189
        %v191 = vsel %vm171, %v148, 0.0
        %v192 = vadd.f32 %v190, %v191
        %v193 = vsel %vm171, %v149, 0.0
        %v194 = vadd.f32 %v192, %v193
        %v195 = vsel %vm171, %v150, 0.0
        %v196 = vadd.f32 %v194, %v195
        %v197 = vsel %vm171, %v151, 0.0
        %v198 = vadd.f32 %v196, %v197
        %v199 = vsel %vm171, %v152, 0.0
        %v200 = vadd.f32 %v198, %v199
        %v201 = vsel %vm171, %v153, 0.0
        %v202 = vadd.f32 %v200, %v201
        %v203 = vsel %vm171, %v154, 0.0
        %v204 = vadd.f32 %v202, %v203
        %v205 = vsel %vm171, %v155, 0.0
        %v206 = vadd.f32 %v204, %v205
        %v207 = vsel %vm171, %v156, 0.0
        %v208 = vadd.f32 %v206, %v207
        %v209 = vsel %vm171, %v157, 0.0
        %v210 = vadd.f32 %v208, %v209
        %v211 = vsel %vm171, %v158, 0.0
        %v212 = vadd.f32 %v210, %v211
        %v213 = vsel %vm171, %v159, 0.0
        %v214 = vadd.f32 %v212, %v213
        %v215 = vsel %vm171, %v160, 0.0
        %v216 = vadd.f32 %v214, %v215
        %v217 = vsel %vm171, %v161, 0.0
        %v218 = vadd.f32 %v216, %v217
        %v219 = vsel %vm171, %v162, 0.0
        %v220 = vadd.f32 %v218, %v219
        %v221 = vsel %vm171, %v163, 0.0
        %v222 = vadd.f32 %v220, %v221
        %v223 = vsel %vm171, %v164, 0.0
        %v224 = vadd.f32 %v222, %v223
        %v225 = vsel %vm171, %v165, 0.0
        %v226 = vadd.f32 %v224, %v225
        %v227 = vsel %vm171, %v166, 0.0
        %v228 = vadd.f32 %v226, %v227
        %v229 = vsel %vm171, %v167, 0.0
        %v230 = vadd.f32 %v228, %v229
        %v231 = vsel %vm171, %v168, 0.0
        %v232 = vadd.f32 %v230, %v231
        %v233 = vsel %vm171, %v169, 0.0
        %v234 = vadd.f32 %v232, %v233
        %v235 = vrot.slane %v234, 4
        %v236 = vadd.f32 %v234, %v235
        %v237 = vrot.slane %v236, 2
        %v238 = vadd.f32 %v236, %v237
        %v239 = vrot.slane %v238, 1
        %v240 = vadd.f32 %v238, %v239
        %v241 = vadd.f32 %v170, %v240
        %vm242 = vcmask 122880
        %243 = vst.msk [vmem:[#allocation2] sm:$0x1] %vm242, %v241
        %v244 = vld [vmem:[#allocation3] sm:$0x1]
        %v245 = vmul.f32 %v138, %v138
        %v246 = vmul.f32 %v139, %v139
        %v247 = vmul.f32 %v140, %v140
        %v248 = vmul.f32 %v141, %v141
        %v249 = vmul.f32 %v142, %v142
        %v250 = vmul.f32 %v143, %v143
        %v251 = vmul.f32 %v144, %v144
        %v252 = vmul.f32 %v145, %v145
        %v253 = vmul.f32 %v146, %v146
        %v254 = vmul.f32 %v147, %v147
        %v255 = vmul.f32 %v148, %v148
        %v256 = vmul.f32 %v149, %v149
        %v257 = vmul.f32 %v150, %v150
        %v258 = vmul.f32 %v151, %v151
        %v259 = vmul.f32 %v152, %v152
        %v260 = vmul.f32 %v153, %v153
        %v261 = vmul.f32 %v154, %v154
        %v262 = vmul.f32 %v155, %v155
        %v263 = vmul.f32 %v156, %v156
        %v264 = vmul.f32 %v157, %v157
        %v265 = vmul.f32 %v158, %v158
        %v266 = vmul.f32 %v159, %v159
        %v267 = vmul.f32 %v160, %v160
        %v268 = vmul.f32 %v161, %v161
        %v269 = vmul.f32 %v162, %v162
        %v270 = vmul.f32 %v163, %v163
        %v271 = vmul.f32 %v164, %v164
        %v272 = vmul.f32 %v165, %v165
        %v273 = vmul.f32 %v166, %v166
        %v274 = vmul.f32 %v167, %v167
        %v275 = vmul.f32 %v168, %v168
        %v276 = vmul.f32 %v169, %v169
        %v277 = vsel %vm171, %v245, 0.0
        %v278 = vsel %vm171, %v246, 0.0
        %v279 = vadd.f32 %v277, %v278
        %v280 = vsel %vm171, %v247, 0.0
        %v281 = vadd.f32 %v279, %v280
        %v282 = vsel %vm171, %v248, 0.0
        %v283 = vadd.f32 %v281, %v282
        %v284 = vsel %vm171, %v249, 0.0
        %v285 = vadd.f32 %v283, %v284
        %v286 = vsel %vm171, %v250, 0.0
        %v287 = vadd.f32 %v285, %v286
        %v288 = vsel %vm171, %v251, 0.0
        %v289 = vadd.f32 %v287, %v288
        %v290 = vsel %vm171, %v252, 0.0
        %v291 = vadd.f32 %v289, %v290
        %v292 = vsel %vm171, %v253, 0.0
        %v293 = vadd.f32 %v291, %v292
        %v294 = vsel %vm171, %v254, 0.0
        %v295 = vadd.f32 %v293, %v294
        %v296 = vsel %vm171, %v255, 0.0
        %v297 = vadd.f32 %v295, %v296
        %v298 = vsel %vm171, %v256, 0.0
        %v299 = vadd.f32 %v297, %v298
        %v300 = vsel %vm171, %v257, 0.0
        %v301 = vadd.f32 %v299, %v300
        %v302 = vsel %vm171, %v258, 0.0
        %v303 = vadd.f32 %v301, %v302
        %v304 = vsel %vm171, %v259, 0.0
        %v305 = vadd.f32 %v303, %v304
        %v306 = vsel %vm171, %v260, 0.0
        %v307 = vadd.f32 %v305, %v306
        %v308 = vsel %vm171, %v261, 0.0
        %v309 = vadd.f32 %v307, %v308
        %v310 = vsel %vm171, %v262, 0.0
        %v311 = vadd.f32 %v309, %v310
        %v312 = vsel %vm171, %v263, 0.0
        %v313 = vadd.f32 %v311, %v312
        %v314 = vsel %vm171, %v264, 0.0
        %v315 = vadd.f32 %v313, %v314
        %v316 = vsel %vm171, %v265, 0.0
        %v317 = vadd.f32 %v315, %v316
        %v318 = vsel %vm171, %v266, 0.0
        %v319 = vadd.f32 %v317, %v318
        %v320 = vsel %vm171, %v267, 0.0
        %v321 = vadd.f32 %v319, %v320
        %v322 = vsel %vm171, %v268, 0.0
        %v323 = vadd.f32 %v321, %v322
        %v324 = vsel %vm171, %v269, 0.0
        %v325 = vadd.f32 %v323, %v324
        %v326 = vsel %vm171, %v270, 0.0
        %v327 = vadd.f32 %v325, %v326
        %v328 = vsel %vm171, %v271, 0.0
        %v329 = vadd.f32 %v327, %v328
        %v330 = vsel %vm171, %v272, 0.0
        %v331 = vadd.f32 %v329, %v330
        %v332 = vsel %vm171, %v273, 0.0
        %v333 = vadd.f32 %v331, %v332
        %v334 = vsel %vm171, %v274, 0.0
        %v335 = vadd.f32 %v333, %v334
        %v336 = vsel %vm171, %v275, 0.0
        %v337 = vadd.f32 %v335, %v336
        %v338 = vsel %vm171, %v276, 0.0
        %v339 = vadd.f32 %v337, %v338
        %v340 = vrot.slane %v339, 4
        %v341 = vadd.f32 %v339, %v340
        %v342 = vrot.slane %v341, 2
        %v343 = vadd.f32 %v341, %v342
        %v344 = vrot.slane %v343, 1
        %v345 = vadd.f32 %v343, %v344
        %v346 = vadd.f32 %v244, %v345
        %347 = vst.msk [vmem:[#allocation3] sm:$0x1] %vm242, %v346
        %p348 = scmp.eq.s32.totalorder %s16, 7
        // Predicated region
        $region29: #{tpu_custom_call.1} parent=23 // pred_check
          %p349 = pneg %p348
        $region30: #{tpu_custom_call.1} parent=23 // pred_check_branch
          %351 = sbr.rel (%p349) target = $region32
        $region31: #{tpu_custom_call.1} parent=23 // pred_region
          %v352 = vld [vmem:[#allocation2] sm:$0x1]
          %353 = vst.msk [vmem:[#allocation4] sm:$0x1] %vm242, %v352
          %v354 = vld [vmem:[#allocation3] sm:$0x1]
          %355 = vst.msk [vmem:[#allocation6] sm:$0x1] %vm242, %v354
        $region32: #{tpu_custom_call.1} parent=23 // pred_fallthru
          _
        // Predicated region
        $region33: #{tpu_custom_call.1} parent=23 // pred_check
          %p356 = pneg %p55
        $region34: #{tpu_custom_call.1} parent=23 // pred_check_branch
          %358 = sbr.rel (%p356) target = $region36
        $region35: #{tpu_custom_call.1} parent=23 // pred_region
          %s360 = ssub.s32 16, 16
          %361 = vsyncadd [#allocation5], %s360
          %s363 = sshll.u32 [#allocation4], 4
          %s364 = int_to_ptr.vmem [resolvable:$true] %s363
          %366 = dma.vmem_to_hbm [thread:$0]  %s364, 16, %s1, [#allocation5]
        $region36: #{tpu_custom_call.1} parent=23 // pred_fallthru
          _
        // Predicated region
        $region37: #{tpu_custom_call.1} parent=23 // pred_check
          %p367 = pneg %p76
        $region38: #{tpu_custom_call.1} parent=23 // pred_check_branch
          %369 = sbr.rel (%p367) target = $region40
        $region39: #{tpu_custom_call.1} parent=23 // pred_region
          %s371 = ssub.s32 16, 16
          %372 = vsyncadd [#allocation7], %s371
          %s374 = sshll.u32 [#allocation6], 4
          %s375 = int_to_ptr.vmem [resolvable:$true] %s374
          %377 = dma.vmem_to_hbm [thread:$0]  %s375, 16, %s2, [#allocation7]
        $region40: #{tpu_custom_call.1} parent=23 // pred_fallthru
          _
        // Predicated region
        $region41: #{tpu_custom_call.1} parent=23 // pred_check
          %p378 = pneg %p55
        $region42: #{tpu_custom_call.1} parent=23 // pred_check_branch
          %380 = sbr.rel (%p378) target = $region44
        $region43: #{tpu_custom_call.1} parent=23 // pred_region
          %381 = dma.done [#allocation5], 16
        $region44: #{tpu_custom_call.1} parent=23 // pred_fallthru
          _
        // Predicated region
        $region45: #{tpu_custom_call.1} parent=23 // pred_check
          %p382 = pneg %p76
        $region46: #{tpu_custom_call.1} parent=23 // pred_check_branch
          %384 = sbr.rel (%p382) target = $region48
        $region47: #{tpu_custom_call.1} parent=23 // pred_region
          %385 = dma.done [#allocation7], 16
        $region48: #{tpu_custom_call.1} parent=23 // pred_fallthru
          _
      $region24: #{tpu_custom_call.1} parent=5 // pred_fallthru
        _
      %p386 = scmp.le.s32.totalorder 2, %s11
      // Predicated region
      $region49: #{tpu_custom_call.1} parent=5 // pred_check
        %p387 = pneg %p386
      $region50: #{tpu_custom_call.1} parent=5 // pred_check_branch
        %389 = sbr.rel (%p387) target = $region52
      $region51: #{tpu_custom_call.1} parent=5 // pred_region
        %s390 = ssub.s32 %s11, 2
      $region52: #{tpu_custom_call.1} parent=5 // pred_fallthru
        _
    $region6: #{tpu_custom_call.1} parent=1 // loop_footer
      %s15 = sadd.s32 1, %s11
    $region7: #{tpu_custom_call.1} parent=1 // loop_footer_branch
      %10 = sbr.rel target = $region3
    $region8: #{tpu_custom_call.1} parent=1 // loop_exit
      _
    %391 = vsyncpa [#allocation5], 1
    %s392 = scalar_lea.sflag [#allocation5], 1
    %393 = vsyncpa %s392, 1
    %394 = vsyncpa [#allocation7], 1

</llo_original>
